<compile_context>
chip_gen: v6e
topology: v6e:2x2x1
jax: 0.10.0
libtpu: 0.0.40
codegen_flags: <defaults>
</compile_context>

<pallas_src>
import jax
import jax.numpy as jnp
from jax.experimental import pallas as pl
from jax.experimental.pallas import tpu as pltpu

IN_DIM = 784
HID = 64
NUM_CLASSES = 10


def mlp_kernel(x_ref,
               w1_ref, b1_ref,
               w2_ref, b2_ref,
               w3_ref, b3_ref,
               w4_ref, b4_ref,
               o_ref):
    # x arrives as f32; cast to bf16 in-kernel (hidden under DMA) for the MXU.
    x = x_ref[...].astype(jnp.bfloat16)

    # fc1 + relu  (bf16 MXU operands, f32 accumulation; bias/ReLU in f32)
    h = jnp.dot(x, w1_ref[...], preferred_element_type=jnp.float32)
    h = jnp.maximum(h + b1_ref[...], 0.0)
    # fc2 + relu
    h = jnp.dot(h.astype(jnp.bfloat16), w2_ref[...], preferred_element_type=jnp.float32)
    h = jnp.maximum(h + b2_ref[...], 0.0)
    # fc3 + relu
    h = jnp.dot(h.astype(jnp.bfloat16), w3_ref[...], preferred_element_type=jnp.float32)
    h = jnp.maximum(h + b3_ref[...], 0.0)
    # fc4 -> (TB, 10) logits in f32 (no lane padding; block covers the full class dim)
    logits = jnp.dot(h.astype(jnp.bfloat16), w4_ref[...], preferred_element_type=jnp.float32)
    logits = logits + b4_ref[...]

    # log_softmax over the class axis, fully in f32 (shift-before-exp for stability)
    m = jnp.max(logits, axis=-1, keepdims=True)
    shifted = logits - m
    lse = jnp.log(jnp.sum(jnp.exp(shifted), axis=-1, keepdims=True))
    o_ref[...] = (shifted - lse).astype(o_ref.dtype)


def _round_up(x, m):
    return ((x + m - 1) // m) * m


def _pick_batch_tile(batch, tile_b):
    """Batch tile: multiple of 8 sublanes, divides the 8-aligned batch when possible
    (avoids a whole-batch pad copy), and gives >= 2 grid steps on large batches so
    v7x's two TensorCores both get work."""
    tile_b = max(8, (tile_b // 8) * 8)
    b8 = _round_up(batch, 8)
    cap = max(8, min(tile_b, _round_up(pl.cdiv(b8, 2), 8)))
    for tb in range(cap, 7, -8):
        if b8 % tb == 0:
            return tb
    return cap


def mlp_forward(x, params, *, tile_b=2048, vmem_limit_bytes=48 * 1024 * 1024):
    """x: [B, 784] float32. params: dict name -> (w, b), w stored as (in, out)."""
    B, D = x.shape
    assert D == IN_DIM

    w1, b1 = params["fc1"]
    w2, b2 = params["fc2"]
    w3, b3 = params["fc3"]
    w4, b4 = params["fc4"]

    TB = _pick_batch_tile(B, tile_b)
    Bp = _round_up(B, TB)
    # Pads only when B is not a multiple of 8 (<= 7 extra rows); otherwise TB divides B.
    x_in = x if Bp == B else jnp.pad(x, ((0, Bp - B), (0, 0)))

    # Weights are tiny (~117 KB total): cast once to bf16, resident in VMEM across steps.
    args = (
        x_in,
        w1.astype(jnp.bfloat16), b1.reshape(1, -1).astype(jnp.float32),
        w2.astype(jnp.bfloat16), b2.reshape(1, -1).astype(jnp.float32),
        w3.astype(jnp.bfloat16), b3.reshape(1, -1).astype(jnp.float32),
        w4.astype(jnp.bfloat16), b4.reshape(1, -1).astype(jnp.float32),
    )

    grid = (Bp // TB,)

    def resident(shape):
        # Same block every grid step -> fetched once, stays resident in VMEM.
        return pl.BlockSpec(shape, lambda i: (0, 0))

    in_specs = [
        pl.BlockSpec((TB, IN_DIM), lambda i: (i, 0)),               # x: tiled over batch (f32)
        resident((IN_DIM, HID)), resident((1, HID)),                # fc1
        resident((HID, HID)), resident((1, HID)),                   # fc2
        resident((HID, HID)), resident((1, HID)),                   # fc3
        resident((HID, NUM_CLASSES)), resident((1, NUM_CLASSES)),   # fc4 (unpadded)
    ]
    out_spec = pl.BlockSpec((TB, NUM_CLASSES), lambda i: (i, 0))

    flops = 2 * Bp * (IN_DIM * HID + HID * HID + HID * HID + HID * NUM_CLASSES)
    bytes_accessed = (
        Bp * IN_DIM * 4                                            # x (f32, read once)
        + (IN_DIM * HID + 2 * HID * HID + HID * NUM_CLASSES) * 2   # weights (bf16)
        + (3 * HID + NUM_CLASSES) * 4                              # biases (f32)
        + Bp * NUM_CLASSES * 4                                     # output (f32)
    )
    transcendentals = Bp * NUM_CLASSES                             # exp in log_softmax

    out = pl.pallas_call(
        mlp_kernel,
        out_shape=jax.ShapeDtypeStruct((Bp, NUM_CLASSES), jnp.float32),
        grid=grid,
        in_specs=in_specs,
        out_specs=out_spec,
        compiler_params=pltpu.CompilerParams(
            dimension_semantics=("parallel",),
            vmem_limit_bytes=vmem_limit_bytes,
        ),
        cost_estimate=pl.CostEstimate(
            flops=flops,
            transcendentals=transcendentals,
            bytes_accessed=bytes_accessed,
        ),
    )(*args)

    return out if Bp == B else out[:B]


def init_params(key):
    """Deterministic PyTorch-like init: U(-1/sqrt(fan_in), 1/sqrt(fan_in))."""
    dims = [(IN_DIM, HID), (HID, HID), (HID, HID), (HID, NUM_CLASSES)]
    names = ["fc1", "fc2", "fc3", "fc4"]
    params = {}
    for name, (fan_in, fan_out) in zip(names, dims):
        key, kw, kb = jax.random.split(key, 3)
        bound = 1.0 / (fan_in ** 0.5)
        # stored directly as (in, out) so the kernel does x @ W + b
        w = jax.random.uniform(kw, (fan_in, fan_out), jnp.float32, -bound, bound)
        b = jax.random.uniform(kb, (fan_out,), jnp.float32, -bound, bound)
        params[name] = (w, b)
    return params


def mlp_reference(x, params):
    """Pure-JAX f32 reference of the PyTorch forward pass."""
    h = x
    for name in ["fc1", "fc2", "fc3"]:
        w, b = params[name]
        h = jnp.maximum(h @ w + b, 0.0)
    w, b = params["fc4"]
    logits = h @ w + b
    return jax.nn.log_softmax(logits, axis=1)


if __name__ == "__main__":
    key = jax.random.PRNGKey(0)
    key, kx = jax.random.split(key)
    B = 8
    x = jax.random.normal(kx, (B, IN_DIM), jnp.float32)

    params = init_params(key)

    out = mlp_forward(x, params)
    out = jax.block_until_ready(out)

    assert out.shape == (B, NUM_CLASSES)
    assert out.dtype == jnp.float32

    # sanity: log_softmax rows should exp-sum to ~1
    row_sums = jnp.sum(jnp.exp(out), axis=1)
    assert bool(jnp.all(jnp.abs(row_sums - 1.0) < 1e-4))

    # loose check vs f32 reference (MXU operands are bf16, f32 accumulate)
    ref = mlp_reference(x, params)
    assert bool(jnp.max(jnp.abs(out - ref)) < 0.1)

    print("KERNEL_OK")
</pallas_src>

<mosaic_0001>
module attributes {stable_mosaic.version = 11 : i64} {
  func.func @mlp_kernel(%arg0: i32, %arg1: memref<8x784xf32, #tpu.memory_space<vmem>>, %arg2: memref<784x64xbf16, #tpu.memory_space<vmem>>, %arg3: memref<1x64xf32, #tpu.memory_space<vmem>>, %arg4: memref<64x64xbf16, #tpu.memory_space<vmem>>, %arg5: memref<1x64xf32, #tpu.memory_space<vmem>>, %arg6: memref<64x64xbf16, #tpu.memory_space<vmem>>, %arg7: memref<1x64xf32, #tpu.memory_space<vmem>>, %arg8: memref<64x10xbf16, #tpu.memory_space<vmem>>, %arg9: memref<1x10xf32, #tpu.memory_space<vmem>>, %arg10: memref<8x10xf32, #tpu.memory_space<vmem>>) attributes {dimension_semantics = [#tpu.dimension_semantics<parallel>], iteration_bounds = array<i64: 1>, scalar_prefetch = 0 : i64, scratch_operands = 0 : i64, tpu.core_type = #tpu.core_type<tc>, window_params = [{transform_indices = @transform_0, window_bounds = array<i64: 8, 784>}, {pipeline_mode = #tpu.pipeline_mode<synchronous>, transform_indices = @transform_1, window_bounds = array<i64: 784, 64>}, {pipeline_mode = #tpu.pipeline_mode<synchronous>, transform_indices = @transform_2, window_bounds = array<i64: 1, 64>}, {pipeline_mode = #tpu.pipeline_mode<synchronous>, transform_indices = @transform_3, window_bounds = array<i64: 64, 64>}, {pipeline_mode = #tpu.pipeline_mode<synchronous>, transform_indices = @transform_4, window_bounds = array<i64: 1, 64>}, {pipeline_mode = #tpu.pipeline_mode<synchronous>, transform_indices = @transform_5, window_bounds = array<i64: 64, 64>}, {pipeline_mode = #tpu.pipeline_mode<synchronous>, transform_indices = @transform_6, window_bounds = array<i64: 1, 64>}, {pipeline_mode = #tpu.pipeline_mode<synchronous>, transform_indices = @transform_7, window_bounds = array<i64: 64, 10>}, {pipeline_mode = #tpu.pipeline_mode<synchronous>, transform_indices = @transform_8, window_bounds = array<i64: 1, 10>}, {transform_indices = @transform_9, window_bounds = array<i64: 8, 10>}]} {
    %c0 = arith.constant 0 : index
    %c0_0 = arith.constant 0 : index
    %0 = vector.load %arg1[%c0, %c0_0] : memref<8x784xf32, #tpu.memory_space<vmem>>, vector<8x784xf32>
    %1 = arith.truncf %0 : vector<8x784xf32> to vector<8x784xbf16>
    %c0_1 = arith.constant 0 : index
    %c0_2 = arith.constant 0 : index
    %2 = vector.load %arg2[%c0_1, %c0_2] : memref<784x64xbf16, #tpu.memory_space<vmem>>, vector<784x64xbf16>
    %cst = arith.constant dense<0.000000e+00> : vector<8x64xf32>
    %3 = tpu.matmul %1, %2, %cst {dimension_numbers = #tpu.dot_dimension_numbers<[1], [0], [0], [1], [0, 0, 1, 1], [], []>} : vector<8x784xbf16>, vector<784x64xbf16>, vector<8x64xf32> -> vector<8x64xf32>
    %c0_3 = arith.constant 0 : index
    %c0_4 = arith.constant 0 : index
    %4 = vector.load %arg3[%c0_3, %c0_4] : memref<1x64xf32, #tpu.memory_space<vmem>>, vector<1x64xf32>
    %5 = vector.broadcast %4 : vector<1x64xf32> to vector<8x64xf32>
    %6 = arith.addf %3, %5 : vector<8x64xf32>
    %cst_5 = arith.constant 0.000000e+00 : f32
    %7 = vector.broadcast %cst_5 : f32 to vector<8x64xf32>
    %8 = arith.maximumf %6, %7 : vector<8x64xf32>
    %9 = arith.truncf %8 : vector<8x64xf32> to vector<8x64xbf16>
    %c0_6 = arith.constant 0 : index
    %c0_7 = arith.constant 0 : index
    %10 = vector.load %arg4[%c0_6, %c0_7] : memref<64x64xbf16, #tpu.memory_space<vmem>>, vector<64x64xbf16>
    %cst_8 = arith.constant dense<0.000000e+00> : vector<8x64xf32>
    %11 = tpu.matmul %9, %10, %cst_8 {dimension_numbers = #tpu.dot_dimension_numbers<[1], [0], [0], [1], [0, 0, 1, 1], [], []>} : vector<8x64xbf16>, vector<64x64xbf16>, vector<8x64xf32> -> vector<8x64xf32>
    %c0_9 = arith.constant 0 : index
    %c0_10 = arith.constant 0 : index
    %12 = vector.load %arg5[%c0_9, %c0_10] : memref<1x64xf32, #tpu.memory_space<vmem>>, vector<1x64xf32>
    %13 = vector.broadcast %12 : vector<1x64xf32> to vector<8x64xf32>
    %14 = arith.addf %11, %13 : vector<8x64xf32>
    %cst_11 = arith.constant 0.000000e+00 : f32
    %15 = vector.broadcast %cst_11 : f32 to vector<8x64xf32>
    %16 = arith.maximumf %14, %15 : vector<8x64xf32>
    %17 = arith.truncf %16 : vector<8x64xf32> to vector<8x64xbf16>
    %c0_12 = arith.constant 0 : index
    %c0_13 = arith.constant 0 : index
    %18 = vector.load %arg6[%c0_12, %c0_13] : memref<64x64xbf16, #tpu.memory_space<vmem>>, vector<64x64xbf16>
    %cst_14 = arith.constant dense<0.000000e+00> : vector<8x64xf32>
    %19 = tpu.matmul %17, %18, %cst_14 {dimension_numbers = #tpu.dot_dimension_numbers<[1], [0], [0], [1], [0, 0, 1, 1], [], []>} : vector<8x64xbf16>, vector<64x64xbf16>, vector<8x64xf32> -> vector<8x64xf32>
    %c0_15 = arith.constant 0 : index
    %c0_16 = arith.constant 0 : index
    %20 = vector.load %arg7[%c0_15, %c0_16] : memref<1x64xf32, #tpu.memory_space<vmem>>, vector<1x64xf32>
    %21 = vector.broadcast %20 : vector<1x64xf32> to vector<8x64xf32>
    %22 = arith.addf %19, %21 : vector<8x64xf32>
    %cst_17 = arith.constant 0.000000e+00 : f32
    %23 = vector.broadcast %cst_17 : f32 to vector<8x64xf32>
    %24 = arith.maximumf %22, %23 : vector<8x64xf32>
    %25 = arith.truncf %24 : vector<8x64xf32> to vector<8x64xbf16>
    %c0_18 = arith.constant 0 : index
    %c0_19 = arith.constant 0 : index
    %26 = vector.load %arg8[%c0_18, %c0_19] : memref<64x10xbf16, #tpu.memory_space<vmem>>, vector<64x10xbf16>
    %cst_20 = arith.constant dense<0.000000e+00> : vector<8x10xf32>
    %27 = tpu.matmul %25, %26, %cst_20 {dimension_numbers = #tpu.dot_dimension_numbers<[1], [0], [0], [1], [0, 0, 1, 1], [], []>} : vector<8x64xbf16>, vector<64x10xbf16>, vector<8x10xf32> -> vector<8x10xf32>
    %c0_21 = arith.constant 0 : index
    %c0_22 = arith.constant 0 : index
    %28 = vector.load %arg9[%c0_21, %c0_22] : memref<1x10xf32, #tpu.memory_space<vmem>>, vector<1x10xf32>
    %29 = vector.broadcast %28 : vector<1x10xf32> to vector<8x10xf32>
    %30 = arith.addf %27, %29 : vector<8x10xf32>
    %cst_23 = arith.constant dense<0xFF800000> : vector<8xf32>
    %31 = vector.multi_reduction <maximumf>, %30, %cst_23 [1] : vector<8x10xf32> to vector<8xf32>
    %32 = vector.shape_cast %31 : vector<8xf32> to vector<8x1xf32>
    %33 = vector.broadcast %32 : vector<8x1xf32> to vector<8x10xf32>
    %34 = arith.subf %30, %33 : vector<8x10xf32>
    %35 = math.exp %34 : vector<8x10xf32>
    %cst_24 = arith.constant dense<0.000000e+00> : vector<8xf32>
    %36 = vector.multi_reduction <add>, %35, %cst_24 [1] : vector<8x10xf32> to vector<8xf32>
    %37 = vector.shape_cast %36 : vector<8xf32> to vector<8x1xf32>
    %38 = math.log %37 : vector<8x1xf32>
    %39 = vector.broadcast %38 : vector<8x1xf32> to vector<8x10xf32>
    %40 = arith.subf %34, %39 : vector<8x10xf32>
    %c0_25 = arith.constant 0 : index
    %c0_26 = arith.constant 0 : index
    %41 = vector.load %arg10[%c0_25, %c0_26] : memref<8x10xf32, #tpu.memory_space<vmem>>, vector<8x10xf32>
    tpu.vector_store %arg10[%c0_25, %c0_26], %40 {strides = array<i32>} : memref<8x10xf32, #tpu.memory_space<vmem>>, vector<8x10xf32>,
    return
  }
  func.func @transform_0(%arg0: i32) -> (i32, i32) {
    %c0_i32 = arith.constant 0 : i32
    %c0_i32_0 = arith.constant 0 : i32
    return %arg0, %c0_i32 : i32, i32
  }
  func.func @transform_1(%arg0: i32) -> (i32, i32) {
    %c0_i32 = arith.constant 0 : i32
    %c0_i32_0 = arith.constant 0 : i32
    %c0_i32_1 = arith.constant 0 : i32
    return %c0_i32, %c0_i32_0 : i32, i32
  }
  func.func @transform_2(%arg0: i32) -> (i32, i32) {
    %c0_i32 = arith.constant 0 : i32
    %c0_i32_0 = arith.constant 0 : i32
    %c0_i32_1 = arith.constant 0 : i32
    return %c0_i32, %c0_i32_0 : i32, i32
  }
  func.func @transform_3(%arg0: i32) -> (i32, i32) {
    %c0_i32 = arith.constant 0 : i32
    %c0_i32_0 = arith.constant 0 : i32
    %c0_i32_1 = arith.constant 0 : i32
    return %c0_i32, %c0_i32_0 : i32, i32
  }
  func.func @transform_4(%arg0: i32) -> (i32, i32) {
    %c0_i32 = arith.constant 0 : i32
    %c0_i32_0 = arith.constant 0 : i32
    %c0_i32_1 = arith.constant 0 : i32
    return %c0_i32, %c0_i32_0 : i32, i32
  }
  func.func @transform_5(%arg0: i32) -> (i32, i32) {
    %c0_i32 = arith.constant 0 : i32
    %c0_i32_0 = arith.constant 0 : i32
    %c0_i32_1 = arith.constant 0 : i32
    return %c0_i32, %c0_i32_0 : i32, i32
  }
  func.func @transform_6(%arg0: i32) -> (i32, i32) {
    %c0_i32 = arith.constant 0 : i32
    %c0_i32_0 = arith.constant 0 : i32
    %c0_i32_1 = arith.constant 0 : i32
    return %c0_i32, %c0_i32_0 : i32, i32
  }
  func.func @transform_7(%arg0: i32) -> (i32, i32) {
    %c0_i32 = arith.constant 0 : i32
    %c0_i32_0 = arith.constant 0 : i32
    %c0_i32_1 = arith.constant 0 : i32
    return %c0_i32, %c0_i32_0 : i32, i32
  }
  func.func @transform_8(%arg0: i32) -> (i32, i32) {
    %c0_i32 = arith.constant 0 : i32
    %c0_i32_0 = arith.constant 0 : i32
    %c0_i32_1 = arith.constant 0 : i32
    return %c0_i32, %c0_i32_0 : i32, i32
  }
  func.func @transform_9(%arg0: i32) -> (i32, i32) {
    %c0_i32 = arith.constant 0 : i32
    %c0_i32_0 = arith.constant 0 : i32
    return %arg0, %c0_i32 : i32, i32
  }
}

</mosaic_0001>

<llo_original>
// kernel: tpu_custom_call.1
$region0: #{tpu_custom_call.1}
  #allocation0 [shape = 'u32[]', space=smem, size = 0x4, offset = 0x4, fixed_abs, tag = 'smem constant byte address 0x4 - core index']
  #allocation1 [shape = 'u32[144,128]{1,0:T(1,128)}', space=vmem, size = 0x12000, scoped, tag = 'internal scratch']
  %s0 = inlined_call_operand.vmem [shape: f32[8,784], index: 0, kind: input, shape index: {}]
  %s1 = inlined_call_operand.vmem [shape: bf16[784,64], index: 1, kind: input, shape index: {}]
  %s2 = inlined_call_operand.vmem [shape: f32[1,64], index: 2, kind: input, shape index: {}]
  %s3 = inlined_call_operand.vmem [shape: bf16[64,64], index: 3, kind: input, shape index: {}]
  %s4 = inlined_call_operand.vmem [shape: f32[1,64], index: 4, kind: input, shape index: {}]
  %s5 = inlined_call_operand.vmem [shape: bf16[64,64], index: 5, kind: input, shape index: {}]
  %s6 = inlined_call_operand.vmem [shape: f32[1,64], index: 6, kind: input, shape index: {}]
  %s7 = inlined_call_operand.vmem [shape: bf16[64,10], index: 7, kind: input, shape index: {}]
  %s8 = inlined_call_operand.vmem [shape: f32[1,10], index: 8, kind: input, shape index: {}]
  %s9 = inlined_call_operand.hbm [shape: f32[8,10], index: 9, kind: output, shape index: {}]
  %s10 = sld [smem:[#allocation0]]
  $region46: #{tpu_custom_call.1} parent=0
    _
  %s12 = ssub.s32 1, %s10
  %s13 = scalar_select 0, %s12, %s10
  $region1: #{tpu_custom_call.1} parent=0
    #allocation2 [shape = 'u8[4096]{0}', space=vmem, size = 0x1000, scoped, tag = 'output window, operand 0, single buffered']
    #allocation3 [shape = 's32[1]{0}', space=sflag, size = 0x4, scoped, tag = 'scoped memory for tpu_custom_call.1']
    %14 = vsyncpa [#allocation3], 0
    // Predicated region
    $region2: #{tpu_custom_call.1} parent=1 // pred_check
      _
    $region3: #{tpu_custom_call.1} parent=1 // pred_check_branch
      %16 = sbr.rel (0) target = $region5
    $region4: #{tpu_custom_call.1} parent=1 // pred_region
      _
    $region5: #{tpu_custom_call.1} parent=1 // pred_fallthru
      _
    // Predicated region
    $region6: #{tpu_custom_call.1} parent=1 // pred_check
      _
    $region7: #{tpu_custom_call.1} parent=1 // pred_check_branch
      %18 = sbr.rel (0) target = $region9
    $region8: #{tpu_custom_call.1} parent=1 // pred_region
      _
    $region9: #{tpu_custom_call.1} parent=1 // pred_fallthru
      _
    // Predicated region
    $region10: #{tpu_custom_call.1} parent=1 // pred_check
      _
    $region11: #{tpu_custom_call.1} parent=1 // pred_check_branch
      %20 = sbr.rel (0) target = $region13
    $region12: #{tpu_custom_call.1} parent=1 // pred_region
      _
    $region13: #{tpu_custom_call.1} parent=1 // pred_fallthru
      _
    // Predicated region
    $region14: #{tpu_custom_call.1} parent=1 // pred_check
      _
    $region15: #{tpu_custom_call.1} parent=1 // pred_check_branch
      %22 = sbr.rel (0) target = $region17
    $region16: #{tpu_custom_call.1} parent=1 // pred_region
      _
    $region17: #{tpu_custom_call.1} parent=1 // pred_fallthru
      _
    // Predicated region
    $region18: #{tpu_custom_call.1} parent=1 // pred_check
      _
    $region19: #{tpu_custom_call.1} parent=1 // pred_check_branch
      %24 = sbr.rel (0) target = $region21
    $region20: #{tpu_custom_call.1} parent=1 // pred_region
      _
    $region21: #{tpu_custom_call.1} parent=1 // pred_fallthru
      _
    // Predicated region
    $region22: #{tpu_custom_call.1} parent=1 // pred_check
      _
    $region23: #{tpu_custom_call.1} parent=1 // pred_check_branch
      %26 = sbr.rel (0) target = $region25
    $region24: #{tpu_custom_call.1} parent=1 // pred_region
      _
    $region25: #{tpu_custom_call.1} parent=1 // pred_fallthru
      _
    // Predicated region
    $region26: #{tpu_custom_call.1} parent=1 // pred_check
      _
    $region27: #{tpu_custom_call.1} parent=1 // pred_check_branch
      %28 = sbr.rel (0) target = $region29
    $region28: #{tpu_custom_call.1} parent=1 // pred_region
      _
    $region29: #{tpu_custom_call.1} parent=1 // pred_fallthru
      _
    // Predicated region
    $region30: #{tpu_custom_call.1} parent=1 // pred_check
      _
    $region31: #{tpu_custom_call.1} parent=1 // pred_check_branch
      %30 = sbr.rel (0) target = $region33
    $region32: #{tpu_custom_call.1} parent=1 // pred_region
      _
    $region33: #{tpu_custom_call.1} parent=1 // pred_fallthru
      _
    // Predicated region
    $region34: #{tpu_custom_call.1} parent=1 // pred_check
      _
    $region35: #{tpu_custom_call.1} parent=1 // pred_check_branch
      %32 = sbr.rel (0) target = $region37
    $region36: #{tpu_custom_call.1} parent=1 // pred_region
      _
    $region37: #{tpu_custom_call.1} parent=1 // pred_fallthru
      _
    %v34 = vld [vmem:[%s0] sm:$0xff]
    %v35 = vld [vmem:[%s0 + $0x8] sm:$0xff]
    %v36 = vld [vmem:[%s0 + $0x10] sm:$0xff]
    %v37 = vld [vmem:[%s0 + $0x18] sm:$0xff]
    %v38 = vld [vmem:[%s0 + $0x20] sm:$0xff]
    %v39 = vld [vmem:[%s0 + $0x28] sm:$0xff]
    %v40 = vld [vmem:[%s0 + $0x30] sm:$0xff]
    %v41 = vpack.c.bf16 %v34, %v34
    %v42 = vpack.c.bf16 %v35, %v35
    %v43 = vpack.c.bf16 %v36, %v36
    %v44 = vpack.c.bf16 %v37, %v37
    %v45 = vpack.c.bf16 %v38, %v38
    %v46 = vpack.c.bf16 %v39, %v39
    %v47 = vpack.c.bf16 %v40, %v40
    %v48 = vld [vmem:[%s1] sm:$0xf]
    %v49 = vld [vmem:[%s1 + $0x4] sm:$0xf]
    %v50 = vld [vmem:[%s1 + $0x8] sm:$0xf]
    %v51 = vld [vmem:[%s1 + $0xc] sm:$0xf]
    %v52 = vld [vmem:[%s1 + $0x10] sm:$0xf]
    %v53 = vld [vmem:[%s1 + $0x14] sm:$0xf]
    %v54 = vld [vmem:[%s1 + $0x18] sm:$0xf]
    %v55 = vld [vmem:[%s1 + $0x1c] sm:$0xf]
    %v56 = vld [vmem:[%s1 + $0x20] sm:$0xf]
    %v57 = vld [vmem:[%s1 + $0x24] sm:$0xf]
    %v58 = vld [vmem:[%s1 + $0x28] sm:$0xf]
    %v59 = vld [vmem:[%s1 + $0x2c] sm:$0xf]
    %v60 = vld [vmem:[%s1 + $0x30] sm:$0xf]
    %v61 = vld [vmem:[%s1 + $0x34] sm:$0xf]
    %v62 = vld [vmem:[%s1 + $0x38] sm:$0xf]
    %v63 = vld [vmem:[%s1 + $0x3c] sm:$0xf]
    %v64 = vld [vmem:[%s1 + $0x40] sm:$0xf]
    %v65 = vld [vmem:[%s1 + $0x44] sm:$0xf]
    %v66 = vld [vmem:[%s1 + $0x48] sm:$0xf]
    %v67 = vld [vmem:[%s1 + $0x4c] sm:$0xf]
    %v68 = vld [vmem:[%s1 + $0x50] sm:$0xf]
    %v69 = vld [vmem:[%s1 + $0x54] sm:$0xf]
    %v70 = vld [vmem:[%s1 + $0x58] sm:$0xf]
    %v71 = vld [vmem:[%s1 + $0x5c] sm:$0xf]
    %v72 = vld [vmem:[%s1 + $0x60] sm:$0xf]
    %v73 = vld [vmem:[%s1 + $0x64] sm:$0xf]
    %v74 = vld [vmem:[%s1 + $0x68] sm:$0xf]
    %v75 = vld [vmem:[%s1 + $0x6c] sm:$0xf]
    %v76 = vld [vmem:[%s1 + $0x70] sm:$0xf]
    %v77 = vld [vmem:[%s1 + $0x74] sm:$0xf]
    %v78 = vld [vmem:[%s1 + $0x78] sm:$0xf]
    %v79 = vld [vmem:[%s1 + $0x7c] sm:$0xf]
    %v80 = vld [vmem:[%s1 + $0x80] sm:$0xf]
    %v81 = vld [vmem:[%s1 + $0x84] sm:$0xf]
    %v82 = vld [vmem:[%s1 + $0x88] sm:$0xf]
    %v83 = vld [vmem:[%s1 + $0x8c] sm:$0xf]
    %v84 = vld [vmem:[%s1 + $0x90] sm:$0xf]
    %v85 = vld [vmem:[%s1 + $0x94] sm:$0xf]
    %v86 = vld [vmem:[%s1 + $0x98] sm:$0xf]
    %v87 = vld [vmem:[%s1 + $0x9c] sm:$0xf]
    %v88 = vld [vmem:[%s1 + $0xa0] sm:$0xf]
    %v89 = vld [vmem:[%s1 + $0xa4] sm:$0xf]
    %v90 = vld [vmem:[%s1 + $0xa8] sm:$0xf]
    %v91 = vld [vmem:[%s1 + $0xac] sm:$0xf]
    %v92 = vld [vmem:[%s1 + $0xb0] sm:$0xf]
    %v93 = vld [vmem:[%s1 + $0xb4] sm:$0xf]
    %v94 = vld [vmem:[%s1 + $0xb8] sm:$0xf]
    %v95 = vld [vmem:[%s1 + $0xbc] sm:$0xf]
    %v96 = vld [vmem:[%s1 + $0xc0] sm:$0xf]
    %v97 = vld [vmem:[%s1 + $0xc4] sm:$0xf]
    %v98 = vld [vmem:[%s1 + $0xc8] sm:$0xf]
    %v99 = vld [vmem:[%s1 + $0xcc] sm:$0xf]
    %v100 = vld [vmem:[%s1 + $0xd0] sm:$0xf]
    %v101 = vld [vmem:[%s1 + $0xd4] sm:$0xf]
    %v102 = vld [vmem:[%s1 + $0xd8] sm:$0xf]
    %v103 = vld [vmem:[%s1 + $0xdc] sm:$0xf]
    %v104 = vld [vmem:[%s1 + $0xe0] sm:$0xf]
    %v105 = vld [vmem:[%s1 + $0xe4] sm:$0xf]
    %v106 = vld [vmem:[%s1 + $0xe8] sm:$0xf]
    %v107 = vld [vmem:[%s1 + $0xec] sm:$0xf]
    %v108 = vld [vmem:[%s1 + $0xf0] sm:$0xf]
    %v109 = vld [vmem:[%s1 + $0xf4] sm:$0xf]
    %v110 = vld [vmem:[%s1 + $0xf8] sm:$0xf]
    %v111 = vld [vmem:[%s1 + $0xfc] sm:$0xf]
    %v112 = vld [vmem:[%s1 + $0x100] sm:$0xf]
    %v113 = vld [vmem:[%s1 + $0x104] sm:$0xf]
    %v114 = vld [vmem:[%s1 + $0x108] sm:$0xf]
    %v115 = vld [vmem:[%s1 + $0x10c] sm:$0xf]
    %v116 = vld [vmem:[%s1 + $0x110] sm:$0xf]
    %v117 = vld [vmem:[%s1 + $0x114] sm:$0xf]
    %v118 = vld [vmem:[%s1 + $0x118] sm:$0xf]
    %v119 = vld [vmem:[%s1 + $0x11c] sm:$0xf]
    %v120 = vld [vmem:[%s1 + $0x120] sm:$0xf]
    %v121 = vld [vmem:[%s1 + $0x124] sm:$0xf]
    %v122 = vld [vmem:[%s1 + $0x128] sm:$0xf]
    %v123 = vld [vmem:[%s1 + $0x12c] sm:$0xf]
    %v124 = vld [vmem:[%s1 + $0x130] sm:$0xf]
    %v125 = vld [vmem:[%s1 + $0x134] sm:$0xf]
    %v126 = vld [vmem:[%s1 + $0x138] sm:$0xf]
    %v127 = vld [vmem:[%s1 + $0x13c] sm:$0xf]
    %v128 = vld [vmem:[%s1 + $0x140] sm:$0xf]
    %v129 = vld [vmem:[%s1 + $0x144] sm:$0xf]
    %v130 = vld [vmem:[%s1 + $0x148] sm:$0xf]
    %v131 = vld [vmem:[%s1 + $0x14c] sm:$0xf]
    %v132 = vld [vmem:[%s1 + $0x150] sm:$0xf]
    %v133 = vld [vmem:[%s1 + $0x154] sm:$0xf]
    %v134 = vld [vmem:[%s1 + $0x158] sm:$0xf]
    %v135 = vld [vmem:[%s1 + $0x15c] sm:$0xf]
    %v136 = vld [vmem:[%s1 + $0x160] sm:$0xf]
    %v137 = vld [vmem:[%s1 + $0x164] sm:$0xf]
    %v138 = vld [vmem:[%s1 + $0x168] sm:$0xf]
    %v139 = vld [vmem:[%s1 + $0x16c] sm:$0xf]
    %v140 = vld [vmem:[%s1 + $0x170] sm:$0xf]
    %v141 = vld [vmem:[%s1 + $0x174] sm:$0xf]
    %v142 = vld [vmem:[%s1 + $0x178] sm:$0xf]
    %v143 = vld [vmem:[%s1 + $0x17c] sm:$0xf]
    %v144 = vld [vmem:[%s1 + $0x180] sm:$0xf]
    %v145 = vld [vmem:[%s1 + $0x184] sm:$0xf]
    %v146 = vld [vmem:[%s2] sm:$0x1]
    %v148 = vlaneseq
    %v149 = vshrl.u32 %v148, 7
    %v150 = vsub.s32 0, %v149
    %v151 = vrot.slane %v146, %v150
    %v251 = vunpack.c.l.b16 %v48
    %v252 = vunpack.c.l.b16 %v49
    %v253 = vunpack.c.l.b16 %v50
    %v254 = vunpack.c.l.b16 %v51
    %v255 = vunpack.c.l.b16 %v52
    %v256 = vunpack.c.l.b16 %v53
    %v257 = vunpack.c.l.b16 %v54
    %v258 = vunpack.c.l.b16 %v55
    %v259 = vunpack.c.l.b16 %v56
    %v260 = vunpack.c.l.b16 %v57
    %v261 = vunpack.c.l.b16 %v58
    %v262 = vunpack.c.l.b16 %v59
    %v263 = vunpack.c.l.b16 %v60
    %v264 = vunpack.c.l.b16 %v61
    %v265 = vunpack.c.l.b16 %v62
    %v266 = vunpack.c.l.b16 %v63
    %v267 = vunpack.c.l.b16 %v64
    %v268 = vunpack.c.l.b16 %v65
    %v269 = vunpack.c.l.b16 %v66
    %v270 = vunpack.c.l.b16 %v67
    %v271 = vunpack.c.l.b16 %v68
    %v272 = vunpack.c.l.b16 %v69
    %v273 = vunpack.c.l.b16 %v70
    %v274 = vunpack.c.l.b16 %v71
    %v275 = vunpack.c.l.b16 %v72
    %v276 = vunpack.c.l.b16 %v73
    %v277 = vunpack.c.l.b16 %v74
    %v278 = vunpack.c.l.b16 %v75
    %v279 = vunpack.c.l.b16 %v76
    %v280 = vunpack.c.l.b16 %v77
    %v281 = vunpack.c.l.b16 %v78
    %v282 = vunpack.c.l.b16 %v79
    %v283 = vunpack.c.l.b16 %v80
    %v284 = vunpack.c.l.b16 %v81
    %v285 = vunpack.c.l.b16 %v82
    %v286 = vunpack.c.l.b16 %v83
    %v287 = vunpack.c.l.b16 %v84
    %v288 = vunpack.c.l.b16 %v85
    %v289 = vunpack.c.l.b16 %v86
    %v290 = vunpack.c.l.b16 %v87
    %v291 = vunpack.c.l.b16 %v88
    %v292 = vunpack.c.l.b16 %v89
    %v293 = vunpack.c.l.b16 %v90
    %v294 = vunpack.c.l.b16 %v91
    %v295 = vunpack.c.l.b16 %v92
    %v296 = vunpack.c.l.b16 %v93
    %v297 = vunpack.c.l.b16 %v94
    %v298 = vunpack.c.l.b16 %v95
    %v299 = vunpack.c.l.b16 %v96
    %v300 = vunpack.c.l.b16 %v97
    %v301 = vunpack.c.l.b16 %v98
    %v302 = vunpack.c.l.b16 %v99
    %v303 = vunpack.c.l.b16 %v100
    %v304 = vunpack.c.l.b16 %v101
    %v305 = vunpack.c.l.b16 %v102
    %v306 = vunpack.c.l.b16 %v103
    %v307 = vunpack.c.l.b16 %v104
    %v308 = vunpack.c.l.b16 %v105
    %v309 = vunpack.c.l.b16 %v106
    %v310 = vunpack.c.l.b16 %v107
    %v311 = vunpack.c.l.b16 %v108
    %v312 = vunpack.c.l.b16 %v109
    %v313 = vunpack.c.l.b16 %v110
    %v314 = vunpack.c.l.b16 %v111
    %v315 = vunpack.c.l.b16 %v112
    %v316 = vunpack.c.l.b16 %v113
    %v317 = vunpack.c.l.b16 %v114
    %v318 = vunpack.c.l.b16 %v115
    %v319 = vunpack.c.l.b16 %v116
    %v320 = vunpack.c.l.b16 %v117
    %v321 = vunpack.c.l.b16 %v118
    %v322 = vunpack.c.l.b16 %v119
    %v323 = vunpack.c.l.b16 %v120
    %v324 = vunpack.c.l.b16 %v121
    %v325 = vunpack.c.l.b16 %v122
    %v326 = vunpack.c.l.b16 %v123
    %v327 = vunpack.c.l.b16 %v124
    %v328 = vunpack.c.l.b16 %v125
    %v329 = vunpack.c.l.b16 %v126
    %v330 = vunpack.c.l.b16 %v127
    %v331 = vunpack.c.l.b16 %v128
    %v332 = vunpack.c.l.b16 %v129
    %v333 = vunpack.c.l.b16 %v130
    %v334 = vunpack.c.l.b16 %v131
    %v335 = vunpack.c.l.b16 %v132
    %v336 = vunpack.c.l.b16 %v133
    %v337 = vunpack.c.l.b16 %v134
    %v338 = vunpack.c.l.b16 %v135
    %v339 = vunpack.c.l.b16 %v136
    %v340 = vunpack.c.l.b16 %v137
    %v341 = vunpack.c.l.b16 %v138
    %v342 = vunpack.c.l.b16 %v139
    %v343 = vunpack.c.l.b16 %v140
    %v344 = vunpack.c.l.b16 %v141
    %v345 = vunpack.c.l.b16 %v142
    %v346 = vunpack.c.l.b16 %v143
    %v347 = vunpack.c.l.b16 %v144
    %v348 = vunpack.c.l.b16 %v145
    %v349 = vpack.c.b16 %v252, %v251
    %v350 = vpack.c.b16 %v254, %v253
    %v351 = vpack.c.b16 %v256, %v255
    %v352 = vpack.c.b16 %v258, %v257
    %v353 = vpack.c.b16 %v260, %v259
    %v354 = vpack.c.b16 %v262, %v261
    %v355 = vpack.c.b16 %v264, %v263
    %v356 = vpack.c.b16 %v266, %v265
    %v357 = vpack.c.b16 %v268, %v267
    %v358 = vpack.c.b16 %v270, %v269
    %v359 = vpack.c.b16 %v272, %v271
    %v360 = vpack.c.b16 %v274, %v273
    %v361 = vpack.c.b16 %v276, %v275
    %v362 = vpack.c.b16 %v278, %v277
    %v363 = vpack.c.b16 %v280, %v279
    %v364 = vpack.c.b16 %v282, %v281
    %v365 = vpack.c.b16 %v284, %v283
    %v366 = vpack.c.b16 %v286, %v285
    %v367 = vpack.c.b16 %v288, %v287
    %v368 = vpack.c.b16 %v290, %v289
    %v369 = vpack.c.b16 %v292, %v291
    %v370 = vpack.c.b16 %v294, %v293
    %v371 = vpack.c.b16 %v296, %v295
    %v372 = vpack.c.b16 %v298, %v297
    %v373 = vpack.c.b16 %v300, %v299
    %v374 = vpack.c.b16 %v302, %v301
    %v375 = vpack.c.b16 %v304, %v303
    %v376 = vpack.c.b16 %v306, %v305
    %v377 = vpack.c.b16 %v308, %v307
    %v378 = vpack.c.b16 %v310, %v309
    %v379 = vpack.c.b16 %v312, %v311
    %v380 = vpack.c.b16 %v314, %v313
    %v381 = vpack.c.b16 %v316, %v315
    %v382 = vpack.c.b16 %v318, %v317
    %v383 = vpack.c.b16 %v320, %v319
    %v384 = vpack.c.b16 %v322, %v321
    %v385 = vpack.c.b16 %v324, %v323
    %v386 = vpack.c.b16 %v326, %v325
    %v387 = vpack.c.b16 %v328, %v327
    %v388 = vpack.c.b16 %v330, %v329
    %v389 = vpack.c.b16 %v332, %v331
    %v390 = vpack.c.b16 %v334, %v333
    %v391 = vpack.c.b16 %v336, %v335
    %v392 = vpack.c.b16 %v338, %v337
    %v393 = vpack.c.b16 %v340, %v339
    %v394 = vpack.c.b16 %v342, %v341
    %v395 = vpack.c.b16 %v344, %v343
    %v396 = vpack.c.b16 %v346, %v345
    %v397 = vpack.c.b16 %v348, %v347
    %vm447 = vcmask 130048
    %v449 = vsel %vm447, %v47, 0
    %451 = vmatprep.subr.bf16.mxu0 0
    %452 = vmatpush1.bf16.msra.mxu0 %v356
    %453 = vmatprep.subr.bf16.mxu0 0
    %454 = vmatpush1.bf16.msra.mxu0 %v355
    %455 = vmatprep.subr.bf16.mxu0 0
    %456 = vmatpush1.bf16.msra.mxu0 %v354
    %457 = vmatprep.subr.bf16.mxu0 0
    %458 = vmatpush1.bf16.msra.mxu0 %v353
    %459 = vmatprep.subr.bf16.mxu0 0
    %460 = vmatpush1.bf16.msra.mxu0 %v352
    %461 = vmatprep.subr.bf16.mxu0 0
    %462 = vmatpush1.bf16.msra.mxu0 %v351
    %463 = vmatprep.subr.bf16.mxu0 0
    %464 = vmatpush1.bf16.msra.mxu0 %v350
    %465 = vmatprep.subr.bf16.mxu0 0
    %466 = vmatpush1.bf16.msra.mxu0 %v349
    %467 = vmatprep.subr.bf16.mxu0 0
    %468 = vmatpush2.bf16.msra.mxu0 %v364
    %469 = vmatprep.subr.bf16.mxu0 0
    %470 = vmatpush2.bf16.msra.mxu0 %v363
    %471 = vmatprep.subr.bf16.mxu0 0
    %472 = vmatpush2.bf16.msra.mxu0 %v362
    %473 = vmatprep.subr.bf16.mxu0 0
    %474 = vmatpush2.bf16.msra.mxu0 %v361
    %475 = vmatprep.subr.bf16.mxu0 0
    %476 = vmatpush2.bf16.msra.mxu0 %v360
    %477 = vmatprep.subr.bf16.mxu0 0
    %478 = vmatpush2.bf16.msra.mxu0 %v359
    %479 = vmatprep.subr.bf16.mxu0 0
    %480 = vmatpush2.bf16.msra.mxu0 %v358
    %481 = vmatprep.subr.bf16.mxu0 0
    %482 = vmatpush2.bf16.msra.mxu0 %v357
    %483 = vmatprep.mubr.bf16.mxu0 %v42
    %484 = vmatmul.mubr.bf16.gmra.mxu0 %v41
    %v485 = vpop.f32.mrf.mxu0
    %v486 = vadd.f32 %v151, %v485
    %v487 = vpop.f32.mrf.mxu0
    %v488 = vpop.f32.mrf.mxu0
    %v489 = vpop.f32.mrf.mxu0
    %490 = vdwg.mxu0
    %491 = vmatprep.subr.bf16.mxu0 0
    %492 = vmatpush1.bf16.msra.mxu0 %v372
    %493 = vmatprep.subr.bf16.mxu0 0
    %494 = vmatpush1.bf16.msra.mxu0 %v371
    %495 = vmatprep.subr.bf16.mxu0 0
    %496 = vmatpush1.bf16.msra.mxu0 %v370
    %497 = vmatprep.subr.bf16.mxu0 0
    %498 = vmatpush1.bf16.msra.mxu0 %v369
    %499 = vmatprep.subr.bf16.mxu0 0
    %500 = vmatpush1.bf16.msra.mxu0 %v368
    %501 = vmatprep.subr.bf16.mxu0 0
    %502 = vmatpush1.bf16.msra.mxu0 %v367
    %503 = vmatprep.subr.bf16.mxu0 0
    %504 = vmatpush1.bf16.msra.mxu0 %v366
    %505 = vmatprep.subr.bf16.mxu0 0
    %506 = vmatpush1.bf16.msra.mxu0 %v365
    %507 = vmatprep.subr.bf16.mxu0 0
    %508 = vmatpush2.bf16.msra.mxu0 %v380
    %509 = vmatprep.subr.bf16.mxu0 0
    %510 = vmatpush2.bf16.msra.mxu0 %v379
    %511 = vmatprep.subr.bf16.mxu0 0
    %512 = vmatpush2.bf16.msra.mxu0 %v378
    %513 = vmatprep.subr.bf16.mxu0 0
    %514 = vmatpush2.bf16.msra.mxu0 %v377
    %515 = vmatprep.subr.bf16.mxu0 0
    %516 = vmatpush2.bf16.msra.mxu0 %v376
    %517 = vmatprep.subr.bf16.mxu0 0
    %518 = vmatpush2.bf16.msra.mxu0 %v375
    %519 = vmatprep.subr.bf16.mxu0 0
    %520 = vmatpush2.bf16.msra.mxu0 %v374
    %521 = vmatprep.subr.bf16.mxu0 0
    %522 = vmatpush2.bf16.msra.mxu0 %v373
    %523 = vmatprep.mubr.bf16.mxu0 %v44
    %524 = vmatmul.mubr.bf16.gmra.mxu0 %v43
    %v525 = vpop.f32.mrf.mxu0
    %v526 = vadd.f32 %v486, %v525
    %v527 = vpop.f32.mrf.mxu0
    %v528 = vpop.f32.mrf.mxu0
    %v529 = vpop.f32.mrf.mxu0
    %530 = vdwg.mxu0
    %531 = vmatprep.subr.bf16.mxu0 0
    %532 = vmatpush1.bf16.msra.mxu0 %v388
    %533 = vmatprep.subr.bf16.mxu0 0
    %534 = vmatpush1.bf16.msra.mxu0 %v387
    %535 = vmatprep.subr.bf16.mxu0 0
    %536 = vmatpush1.bf16.msra.mxu0 %v386
    %537 = vmatprep.subr.bf16.mxu0 0
    %538 = vmatpush1.bf16.msra.mxu0 %v385
    %539 = vmatprep.subr.bf16.mxu0 0
    %540 = vmatpush1.bf16.msra.mxu0 %v384
    %541 = vmatprep.subr.bf16.mxu0 0
    %542 = vmatpush1.bf16.msra.mxu0 %v383
    %543 = vmatprep.subr.bf16.mxu0 0
    %544 = vmatpush1.bf16.msra.mxu0 %v382
    %545 = vmatprep.subr.bf16.mxu0 0
    %546 = vmatpush1.bf16.msra.mxu0 %v381
    %547 = vmatprep.subr.bf16.mxu0 0
    %548 = vmatpush2.bf16.msra.mxu0 %v396
    %549 = vmatprep.subr.bf16.mxu0 0
    %550 = vmatpush2.bf16.msra.mxu0 %v395
    %551 = vmatprep.subr.bf16.mxu0 0
    %552 = vmatpush2.bf16.msra.mxu0 %v394
    %553 = vmatprep.subr.bf16.mxu0 0
    %554 = vmatpush2.bf16.msra.mxu0 %v393
    %555 = vmatprep.subr.bf16.mxu0 0
    %556 = vmatpush2.bf16.msra.mxu0 %v392
    %557 = vmatprep.subr.bf16.mxu0 0
    %558 = vmatpush2.bf16.msra.mxu0 %v391
    %559 = vmatprep.subr.bf16.mxu0 0
    %560 = vmatpush2.bf16.msra.mxu0 %v390
    %561 = vmatprep.subr.bf16.mxu0 0
    %562 = vmatpush2.bf16.msra.mxu0 %v389
    %563 = vmatprep.mubr.bf16.mxu0 %v46
    %564 = vmatmul.mubr.bf16.gmra.mxu0 %v45
    %v565 = vpop.f32.mrf.mxu0
    %v566 = vadd.f32 %v526, %v565
    %v567 = vpop.f32.mrf.mxu0
    %v568 = vpop.f32.mrf.mxu0
    %v569 = vpop.f32.mrf.mxu0
    %570 = vdwg.mxu0
    %571 = vmatprep.subr.bf16.mxu0 0
    %572 = vmatpush1.bf16.msra.mxu0 0
    %573 = vmatprep.subr.bf16.mxu0 0
    %574 = vmatpush1.bf16.msra.mxu0 0
    %575 = vmatprep.subr.bf16.mxu0 0
    %576 = vmatpush1.bf16.msra.mxu0 0
    %577 = vmatprep.subr.bf16.mxu0 0
    %578 = vmatpush1.bf16.msra.mxu0 0
    %579 = vmatprep.subr.bf16.mxu0 0
    %580 = vmatpush1.bf16.msra.mxu0 0
    %581 = vmatprep.subr.bf16.mxu0 0
    %582 = vmatpush1.bf16.msra.mxu0 0
    %583 = vmatprep.subr.bf16.mxu0 0
    %584 = vmatpush1.bf16.msra.mxu0 0
    %585 = vmatprep.subr.bf16.mxu0 0
    %586 = vmatpush1.bf16.msra.mxu0 %v397
    %587 = vmatprep.subr.bf16.mxu0 0
    %588 = vmatpush2.bf16.msra.mxu0 0
    %589 = vmatprep.subr.bf16.mxu0 0
    %590 = vmatpush2.bf16.msra.mxu0 0
    %591 = vmatprep.subr.bf16.mxu0 0
    %592 = vmatpush2.bf16.msra.mxu0 0
    %593 = vmatprep.subr.bf16.mxu0 0
    %594 = vmatpush2.bf16.msra.mxu0 0
    %595 = vmatprep.subr.bf16.mxu0 0
    %596 = vmatpush2.bf16.msra.mxu0 0
    %597 = vmatprep.subr.bf16.mxu0 0
    %598 = vmatpush2.bf16.msra.mxu0 0
    %599 = vmatprep.subr.bf16.mxu0 0
    %600 = vmatpush2.bf16.msra.mxu0 0
    %601 = vmatprep.subr.bf16.mxu0 0
    %602 = vmatpush2.bf16.msra.mxu0 0
    %603 = vmatprep.mubr.bf16.mxu0 0
    %604 = vmatmul.mubr.bf16.gmra.mxu0 %v449
    %v605 = vpop.f32.mrf.mxu0
    %v606 = vadd.f32 %v566, %v605
    %v607 = vpop.f32.mrf.mxu0
    %v608 = vpop.f32.mrf.mxu0
    %v609 = vpop.f32.mrf.mxu0
    %610 = vdwg.mxu0
    %v611 = vmax.f32 %v606, 0.0
    %v612 = vpack.c.bf16 %v611, %v611
    %v613 = vld [vmem:[%s3] sm:$0xf]
    %v614 = vld [vmem:[%s3 + $0x4] sm:$0xf]
    %v615 = vld [vmem:[%s3 + $0x8] sm:$0xf]
    %v616 = vld [vmem:[%s3 + $0xc] sm:$0xf]
    %v617 = vld [vmem:[%s3 + $0x10] sm:$0xf]
    %v618 = vld [vmem:[%s3 + $0x14] sm:$0xf]
    %v619 = vld [vmem:[%s3 + $0x18] sm:$0xf]
    %v620 = vld [vmem:[%s3 + $0x1c] sm:$0xf]
    %v621 = vld [vmem:[%s4] sm:$0x1]
    %v623 = vlaneseq
    %v624 = vshrl.u32 %v623, 7
    %v625 = vsub.s32 0, %v624
    %v626 = vrot.slane %v621, %v625
    %v636 = vunpack.c.l.b16 %v613
    %v637 = vunpack.c.l.b16 %v614
    %v638 = vunpack.c.l.b16 %v615
    %v639 = vunpack.c.l.b16 %v616
    %v640 = vunpack.c.l.b16 %v617
    %v641 = vunpack.c.l.b16 %v618
    %v642 = vunpack.c.l.b16 %v619
    %v643 = vunpack.c.l.b16 %v620
    %v644 = vpack.c.b16 %v637, %v636
    %v645 = vpack.c.b16 %v639, %v638
    %v646 = vpack.c.b16 %v641, %v640
    %v647 = vpack.c.b16 %v643, %v642
    %vm652 = vcmask 523264
    %v654 = vsel %vm652, %v612, 0
    %656 = vmatprep.subr.bf16.mxu0 0
    %657 = vmatpush1.bf16.msra.mxu0 0
    %658 = vmatprep.subr.bf16.mxu0 0
    %659 = vmatpush1.bf16.msra.mxu0 0
    %660 = vmatprep.subr.bf16.mxu0 0
    %661 = vmatpush1.bf16.msra.mxu0 0
    %662 = vmatprep.subr.bf16.mxu0 0
    %663 = vmatpush1.bf16.msra.mxu0 0
    %664 = vmatprep.subr.bf16.mxu0 0
    %665 = vmatpush1.bf16.msra.mxu0 %v647
    %666 = vmatprep.subr.bf16.mxu0 0
    %667 = vmatpush1.bf16.msra.mxu0 %v646
    %668 = vmatprep.subr.bf16.mxu0 0
    %669 = vmatpush1.bf16.msra.mxu0 %v645
    %670 = vmatprep.subr.bf16.mxu0 0
    %671 = vmatpush1.bf16.msra.mxu0 %v644
    %672 = vmatprep.subr.bf16.mxu0 0
    %673 = vmatpush2.bf16.msra.mxu0 0
    %674 = vmatprep.subr.bf16.mxu0 0
    %675 = vmatpush2.bf16.msra.mxu0 0
    %676 = vmatprep.subr.bf16.mxu0 0
    %677 = vmatpush2.bf16.msra.mxu0 0
    %678 = vmatprep.subr.bf16.mxu0 0
    %679 = vmatpush2.bf16.msra.mxu0 0
    %680 = vmatprep.subr.bf16.mxu0 0
    %681 = vmatpush2.bf16.msra.mxu0 0
    %682 = vmatprep.subr.bf16.mxu0 0
    %683 = vmatpush2.bf16.msra.mxu0 0
    %684 = vmatprep.subr.bf16.mxu0 0
    %685 = vmatpush2.bf16.msra.mxu0 0
    %686 = vmatprep.subr.bf16.mxu0 0
    %687 = vmatpush2.bf16.msra.mxu0 0
    %688 = vmatprep.mubr.bf16.mxu0 0
    %689 = vmatmul.mubr.bf16.gmra.mxu0 %v654
    %v690 = vpop.f32.mrf.mxu0
    %v691 = vadd.f32 %v626, %v690
    %v692 = vpop.f32.mrf.mxu0
    %v693 = vpop.f32.mrf.mxu0
    %v694 = vpop.f32.mrf.mxu0
    %695 = vdwg.mxu0
    %v696 = vmax.f32 %v691, 0.0
    %v697 = vpack.c.bf16 %v696, %v696
    %v698 = vld [vmem:[%s5] sm:$0xf]
    %v699 = vld [vmem:[%s5 + $0x4] sm:$0xf]
    %v700 = vld [vmem:[%s5 + $0x8] sm:$0xf]
    %v701 = vld [vmem:[%s5 + $0xc] sm:$0xf]
    %v702 = vld [vmem:[%s5 + $0x10] sm:$0xf]
    %v703 = vld [vmem:[%s5 + $0x14] sm:$0xf]
    %v704 = vld [vmem:[%s5 + $0x18] sm:$0xf]
    %v705 = vld [vmem:[%s5 + $0x1c] sm:$0xf]
    %v706 = vld [vmem:[%s6] sm:$0x1]
    %v708 = vlaneseq
    %v709 = vshrl.u32 %v708, 7
    %v710 = vsub.s32 0, %v709
    %v711 = vrot.slane %v706, %v710
    %v721 = vunpack.c.l.b16 %v698
    %v722 = vunpack.c.l.b16 %v699
    %v723 = vunpack.c.l.b16 %v700
    %v724 = vunpack.c.l.b16 %v701
    %v725 = vunpack.c.l.b16 %v702
    %v726 = vunpack.c.l.b16 %v703
    %v727 = vunpack.c.l.b16 %v704
    %v728 = vunpack.c.l.b16 %v705
    %v729 = vpack.c.b16 %v722, %v721
    %v730 = vpack.c.b16 %v724, %v723
    %v731 = vpack.c.b16 %v726, %v725
    %v732 = vpack.c.b16 %v728, %v727
    %v738 = vsel %vm652, %v697, 0
    %740 = vmatprep.subr.bf16.mxu0 0
    %741 = vmatpush1.bf16.msra.mxu0 0
    %742 = vmatprep.subr.bf16.mxu0 0
    %743 = vmatpush1.bf16.msra.mxu0 0
    %744 = vmatprep.subr.bf16.mxu0 0
    %745 = vmatpush1.bf16.msra.mxu0 0
    %746 = vmatprep.subr.bf16.mxu0 0
    %747 = vmatpush1.bf16.msra.mxu0 0
    %748 = vmatprep.subr.bf16.mxu0 0
    %749 = vmatpush1.bf16.msra.mxu0 %v732
    %750 = vmatprep.subr.bf16.mxu0 0
    %751 = vmatpush1.bf16.msra.mxu0 %v731
    %752 = vmatprep.subr.bf16.mxu0 0
    %753 = vmatpush1.bf16.msra.mxu0 %v730
    %754 = vmatprep.subr.bf16.mxu0 0
    %755 = vmatpush1.bf16.msra.mxu0 %v729
    %756 = vmatprep.subr.bf16.mxu0 0
    %757 = vmatpush2.bf16.msra.mxu0 0
    %758 = vmatprep.subr.bf16.mxu0 0
    %759 = vmatpush2.bf16.msra.mxu0 0
    %760 = vmatprep.subr.bf16.mxu0 0
    %761 = vmatpush2.bf16.msra.mxu0 0
    %762 = vmatprep.subr.bf16.mxu0 0
    %763 = vmatpush2.bf16.msra.mxu0 0
    %764 = vmatprep.subr.bf16.mxu0 0
    %765 = vmatpush2.bf16.msra.mxu0 0
    %766 = vmatprep.subr.bf16.mxu0 0
    %767 = vmatpush2.bf16.msra.mxu0 0
    %768 = vmatprep.subr.bf16.mxu0 0
    %769 = vmatpush2.bf16.msra.mxu0 0
    %770 = vmatprep.subr.bf16.mxu0 0
    %771 = vmatpush2.bf16.msra.mxu0 0
    %772 = vmatprep.mubr.bf16.mxu0 0
    %773 = vmatmul.mubr.bf16.gmra.mxu0 %v738
    %v774 = vpop.f32.mrf.mxu0
    %v775 = vadd.f32 %v711, %v774
    %v776 = vpop.f32.mrf.mxu0
    %v777 = vpop.f32.mrf.mxu0
    %v778 = vpop.f32.mrf.mxu0
    %779 = vdwg.mxu0
    %v780 = vmax.f32 %v775, 0.0
    %v781 = vpack.c.bf16 %v780, %v780
    %v782 = vld [vmem:[%s7] sm:$0xf]
    %v783 = vld [vmem:[%s7 + $0x4] sm:$0xf]
    %v784 = vld [vmem:[%s7 + $0x8] sm:$0xf]
    %v785 = vld [vmem:[%s7 + $0xc] sm:$0xf]
    %v786 = vld [vmem:[%s7 + $0x10] sm:$0xf]
    %v787 = vld [vmem:[%s7 + $0x14] sm:$0xf]
    %v788 = vld [vmem:[%s7 + $0x18] sm:$0xf]
    %v789 = vld [vmem:[%s7 + $0x1c] sm:$0xf]
    %v790 = vld [vmem:[%s8] sm:$0x1]
    %v792 = vlaneseq
    %v793 = vshrl.u32 %v792, 7
    %v794 = vsub.s32 0, %v793
    %v795 = vrot.slane %v790, %v794
    %v805 = vunpack.c.l.b16 %v782
    %v806 = vunpack.c.l.b16 %v783
    %v807 = vunpack.c.l.b16 %v784
    %v808 = vunpack.c.l.b16 %v785
    %v809 = vunpack.c.l.b16 %v786
    %v810 = vunpack.c.l.b16 %v787
    %v811 = vunpack.c.l.b16 %v788
    %v812 = vunpack.c.l.b16 %v789
    %v813 = vpack.c.b16 %v806, %v805
    %v814 = vpack.c.b16 %v808, %v807
    %v815 = vpack.c.b16 %v810, %v809
    %v816 = vpack.c.b16 %v812, %v811
    %v822 = vsel %vm652, %v781, 0
    %824 = vmatprep.subr.bf16.mxu0 0
    %825 = vmatpush1.bf16.msra.mxu0 0
    %826 = vmatprep.subr.bf16.mxu0 0
    %827 = vmatpush1.bf16.msra.mxu0 0
    %828 = vmatprep.subr.bf16.mxu0 0
    %829 = vmatpush1.bf16.msra.mxu0 0
    %830 = vmatprep.subr.bf16.mxu0 0
    %831 = vmatpush1.bf16.msra.mxu0 0
    %832 = vmatprep.subr.bf16.mxu0 0
    %833 = vmatpush1.bf16.msra.mxu0 %v816
    %834 = vmatprep.subr.bf16.mxu0 0
    %835 = vmatpush1.bf16.msra.mxu0 %v815
    %836 = vmatprep.subr.bf16.mxu0 0
    %837 = vmatpush1.bf16.msra.mxu0 %v814
    %838 = vmatprep.subr.bf16.mxu0 0
    %839 = vmatpush1.bf16.msra.mxu0 %v813
    %840 = vmatprep.subr.bf16.mxu0 0
    %841 = vmatpush2.bf16.msra.mxu0 0
    %842 = vmatprep.subr.bf16.mxu0 0
    %843 = vmatpush2.bf16.msra.mxu0 0
    %844 = vmatprep.subr.bf16.mxu0 0
    %845 = vmatpush2.bf16.msra.mxu0 0
    %846 = vmatprep.subr.bf16.mxu0 0
    %847 = vmatpush2.bf16.msra.mxu0 0
    %848 = vmatprep.subr.bf16.mxu0 0
    %849 = vmatpush2.bf16.msra.mxu0 0
    %850 = vmatprep.subr.bf16.mxu0 0
    %851 = vmatpush2.bf16.msra.mxu0 0
    %852 = vmatprep.subr.bf16.mxu0 0
    %853 = vmatpush2.bf16.msra.mxu0 0
    %854 = vmatprep.subr.bf16.mxu0 0
    %855 = vmatpush2.bf16.msra.mxu0 0
    %856 = vmatprep.mubr.bf16.mxu0 0
    %857 = vmatmul.mubr.bf16.gmra.mxu0 %v822
    %v858 = vpop.f32.mrf.mxu0
    %v859 = vadd.f32 %v795, %v858
    %v860 = vpop.f32.mrf.mxu0
    %v861 = vpop.f32.mrf.mxu0
    %v862 = vpop.f32.mrf.mxu0
    %863 = vdwg.mxu0
    %vm864 = vcmask 80896
    %v865 = vsel %vm864, %v859, -inf
    %866 = vmax.xlane.f32.xlu0 %v865
    %v867 = vpop.xlane.xlu0 %866
    %v868 = vsub.f32 %v859, %v867
    %v869 = vmul.f32 %v868, 1.442695
    %v870 = vpow.pop %v869
    %v871 = vsel %vm864, %v870, 0.0
    %872 = vadd.xlane.f32.xlu0 %v871
    %v873 = vpop.xlane.xlu0 %872
    %v874 = vlog2.pop %v873
    %v875 = vmul.f32 %v874, 0.6931472
    %v876 = vsub.f32 %v868, %v875
    %877 = vst.msk [vmem:[#allocation2] sm:$0xff] %vm864, %v876
    // Predicated region
    $region38: #{tpu_custom_call.1} parent=1 // pred_check
      _
    $region39: #{tpu_custom_call.1} parent=1 // pred_check_branch
      %879 = sbr.rel (0) target = $region41
    $region40: #{tpu_custom_call.1} parent=1 // pred_region
      %s881 = ssub.s32 128, 128
      %882 = vsyncadd [#allocation3], %s881
      %s884 = sshll.u32 [#allocation2], 4
      %s885 = int_to_ptr.vmem [resolvable:$true] %s884
      %887 = dma.vmem_to_hbm [thread:$0]  %s885, 128, %s9, [#allocation3]
    $region41: #{tpu_custom_call.1} parent=1 // pred_fallthru
      _
    // Predicated region
    $region42: #{tpu_custom_call.1} parent=1 // pred_check
      _
    $region43: #{tpu_custom_call.1} parent=1 // pred_check_branch
      %889 = sbr.rel (0) target = $region45
    $region44: #{tpu_custom_call.1} parent=1 // pred_region
      %890 = dma.done [#allocation3], 128
    $region45: #{tpu_custom_call.1} parent=1 // pred_fallthru
      _
    %891 = vsyncpa [#allocation3], 1

</llo_original>
